<compile_context>
chip_gen: v7x
topology: tpu7x:2x2x1
jax: 0.10.0
libtpu: 0.0.40
codegen_flags: <defaults>
</compile_context>

<pallas_src>
import functools
import operator

import jax
import jax.numpy as jnp
from jax import lax
from jax.experimental import pallas as pl
from jax.experimental.pallas import tpu as pltpu


# Contraction on dim 1 of BOTH operands:  (M, K) . (N, K) -> (M, N)   (i.e. x @ W.T, no transpose op)
_DN = (((1,), (1,)), ((), ()))


def _proj_cls_kernel(x_ref, wproj_ref, wclass_ref, h_ref, cls_ref):
    """h = x @ W_proj.T ; cls = x @ W_class.T  (row tile resident, weights resident)."""
    x = x_ref[...]
    h = lax.dot_general(x, wproj_ref[...], _DN, preferred_element_type=jnp.float32)
    h_ref[...] = h.astype(h_ref.dtype)
    cls_ref[...] = lax.dot_general(x, wclass_ref[...], _DN,
                                   preferred_element_type=jnp.float32)


def _cls_kernel(x_ref, wclass_ref, cls_ref):
    """cls = x @ W_class.T  (no-projection configuration: input_dim == emb_dim)."""
    cls_ref[...] = lax.dot_general(x_ref[...], wclass_ref[...], _DN,
                                   preferred_element_type=jnp.float32)


def _words_kernel(h_ref, emb_ref, words_ref):
    """words tile = h(row tile) @ emb(vocab tile).T — the HBM-streaming matmul."""
    words_ref[...] = lax.dot_general(h_ref[...], emb_ref[...], _DN,
                                     preferred_element_type=jnp.float32)


def _pick_row_tile(m):
    """Row (M) tile: large power-of-two divisor if M is big, else the full extent."""
    for t in (512, 256, 128):
        if m >= t and m % t == 0:
            return t
    return m  # full extent satisfies the (8,128) layout rule for any M


def _pick_vocab_tile(num_words, max_tile):
    """Vocab (lane) tile: multiple of 128 for lane-dense stores, streamed from HBM."""
    if num_words % 128 == 0:
        return min(max_tile, num_words)
    # TODO(synk): pad the vocab to a multiple of 128 so odd vocab sizes can still be
    # tiled (currently falls back to a single full-vocab block for such sizes).
    return num_words


def tied_head_forward(x, tied_emb, w_proj, w_class, *, vocab_tile=512):
    """JAX/Pallas equivalent of TiedHeadModule.forward.

    x:        (..., input_dim)
    tied_emb: (num_words, emb_dim)            -- tied embedding matrix
    w_proj:   (emb_dim, input_dim) or None    -- None iff input_dim == emb_dim
    w_class:  (num_classes, input_dim)
    returns:  (prod(x.shape[:-1]), num_words + num_classes) float32
    """
    input_dim = x.shape[-1]
    num_words, emb_dim = tied_emb.shape
    num_classes = w_class.shape[0]

    m = functools.reduce(operator.mul, x.shape[:-1], 1)
    x_flat = x.reshape(m, input_dim)

    tm = _pick_row_tile(m)
    n_m = m // tm
    row_parallel = pltpu.CompilerParams(dimension_semantics=("parallel",))

    # ---- Kernel A: projection (optional) + class logits, computed exactly once. ----
    if w_proj is not None:
        assert w_proj.shape == (emb_dim, input_dim)
        h, cls = pl.pallas_call(
            _proj_cls_kernel,
            out_shape=(jax.ShapeDtypeStruct((m, emb_dim), tied_emb.dtype),
                       jax.ShapeDtypeStruct((m, num_classes), jnp.float32)),
            grid=(n_m,),
            in_specs=[pl.BlockSpec((tm, input_dim), lambda i: (i, 0)),
                      pl.BlockSpec((emb_dim, input_dim), lambda i: (0, 0)),
                      pl.BlockSpec((num_classes, input_dim), lambda i: (0, 0))],
            out_specs=[pl.BlockSpec((tm, emb_dim), lambda i: (i, 0)),
                       pl.BlockSpec((tm, num_classes), lambda i: (i, 0))],
            compiler_params=row_parallel,
        )(x_flat, w_proj, w_class)
    else:
        assert input_dim == emb_dim, "w_proj may only be None when input_dim == emb_dim"
        cls = pl.pallas_call(
            _cls_kernel,
            out_shape=jax.ShapeDtypeStruct((m, num_classes), jnp.float32),
            grid=(n_m,),
            in_specs=[pl.BlockSpec((tm, input_dim), lambda i: (i, 0)),
                      pl.BlockSpec((num_classes, input_dim), lambda i: (0, 0))],
            out_specs=pl.BlockSpec((tm, num_classes), lambda i: (i, 0)),
            compiler_params=row_parallel,
        )(x_flat, w_class)
        h = x_flat.astype(tied_emb.dtype)  # identity projection: no matmul, no eye()

    # ---- Kernel B: word logits, vocab-tiled (tied_emb streamed from HBM). ----
    tn = _pick_vocab_tile(num_words, vocab_tile)
    n_v = pl.cdiv(num_words, tn)
    # Per-step VMEM ~ 2*(tn*emb_dim) + 2*(tm*tn) + tm*emb_dim elements; with the default
    # tiles this sits well inside the scoped VMEM default on v5e/v6e/v7x.
    words = pl.pallas_call(
        _words_kernel,
        out_shape=jax.ShapeDtypeStruct((m, num_words), jnp.float32),
        grid=(n_m, n_v),
        in_specs=[pl.BlockSpec((tm, emb_dim), lambda i, j: (i, 0)),   # h: resident per row tile
                  pl.BlockSpec((tn, emb_dim), lambda i, j: (j, 0))],  # emb: streamed vocab tiles
        out_specs=pl.BlockSpec((tm, tn), lambda i, j: (i, j)),        # lane-dense (tn % 128 == 0)
        compiler_params=pltpu.CompilerParams(
            dimension_semantics=("parallel", "parallel")),
    )(h, tied_emb)

    # The module returns a single FloatTensor(inp_sz, num_words + num_classes).
    return jnp.concatenate([words, cls], axis=-1)


def _reference(x, tied_emb, w_proj, w_class):
    m = functools.reduce(operator.mul, x.shape[:-1], 1)
    xf = x.reshape(m, x.shape[-1]).astype(jnp.float32)
    h = xf if w_proj is None else xf @ w_proj.astype(jnp.float32).T
    words = h @ tied_emb.astype(jnp.float32).T
    cls = xf @ w_class.astype(jnp.float32).T
    return jnp.concatenate([words, cls], axis=-1)


if __name__ == "__main__":
    key = jax.random.PRNGKey(0)
    k_x, k_emb, k_proj, k_cls, k_x2, k_emb2, k_cls2 = jax.random.split(key, 7)

    batch, seq = 2, 8                 # M = 16 rows after flattening
    input_dim, emb_dim = 32, 64       # != -> exercises the extra projection Linear
    num_words, num_classes = 1024, 128  # vocab tiled as 2 x 512

    # --- Config 1: input_dim != emb_dim (projection + tied embedding) ---
    x = jax.random.normal(k_x, (batch, seq, input_dim), dtype=jnp.float32)
    tied_emb = jax.random.normal(k_emb, (num_words, emb_dim), dtype=jnp.float32) * 0.05
    w_proj = jax.random.normal(k_proj, (emb_dim, input_dim), dtype=jnp.float32) * 0.05
    w_class = jax.random.normal(k_cls, (num_classes, input_dim), dtype=jnp.float32) * 0.05

    out = jax.block_until_ready(tied_head_forward(x, tied_emb, w_proj, w_class))
    ref = _reference(x, tied_emb, w_proj, w_class)
    assert out.shape == (batch * seq, num_words + num_classes), out.shape
    assert jnp.allclose(out, ref, atol=1e-4, rtol=1e-4), float(jnp.max(jnp.abs(out - ref)))

    # --- Config 2: input_dim == emb_dim (no projection matmul at all) ---
    x2 = jax.random.normal(k_x2, (batch, seq, emb_dim), dtype=jnp.float32)
    tied_emb2 = jax.random.normal(k_emb2, (num_words, emb_dim), dtype=jnp.float32) * 0.05
    w_class2 = jax.random.normal(k_cls2, (num_classes, emb_dim), dtype=jnp.float32) * 0.05

    out2 = jax.block_until_ready(tied_head_forward(x2, tied_emb2, None, w_class2))
    ref2 = _reference(x2, tied_emb2, None, w_class2)
    assert out2.shape == (batch * seq, num_words + num_classes), out2.shape
    assert jnp.allclose(out2, ref2, atol=1e-4, rtol=1e-4), float(jnp.max(jnp.abs(out2 - ref2)))

    print("KERNEL_OK")
</pallas_src>

<mosaic_0001>
module attributes {stable_mosaic.version = 11 : i64} {
  func.func @_proj_cls_kernel(%arg0: i32, %arg1: memref<16x32xf32, #tpu.memory_space<vmem>>, %arg2: memref<64x32xf32, #tpu.memory_space<vmem>>, %arg3: memref<128x32xf32, #tpu.memory_space<vmem>>, %arg4: memref<16x64xf32, #tpu.memory_space<vmem>>, %arg5: memref<16x128xf32, #tpu.memory_space<vmem>>) attributes {dimension_semantics = [#tpu.dimension_semantics<parallel>], iteration_bounds = array<i64: 1>, scalar_prefetch = 0 : i64, scratch_operands = 0 : i64, tpu.core_type = #tpu.core_type<tc>, window_params = [{transform_indices = @transform_0, window_bounds = array<i64: 16, 32>}, {pipeline_mode = #tpu.pipeline_mode<synchronous>, transform_indices = @transform_1, window_bounds = array<i64: 64, 32>}, {pipeline_mode = #tpu.pipeline_mode<synchronous>, transform_indices = @transform_2, window_bounds = array<i64: 128, 32>}, {transform_indices = @transform_3, window_bounds = array<i64: 16, 64>}, {transform_indices = @transform_4, window_bounds = array<i64: 16, 128>}]} {
    %c0 = arith.constant 0 : index
    %c0_0 = arith.constant 0 : index
    %0 = vector.load %arg1[%c0, %c0_0] : memref<16x32xf32, #tpu.memory_space<vmem>>, vector<16x32xf32>
    %c0_1 = arith.constant 0 : index
    %c0_2 = arith.constant 0 : index
    %1 = vector.load %arg2[%c0_1, %c0_2] : memref<64x32xf32, #tpu.memory_space<vmem>>, vector<64x32xf32>
    %cst = arith.constant dense<0.000000e+00> : vector<16x64xf32>
    %2 = tpu.matmul %0, %1, %cst {dimension_numbers = #tpu.dot_dimension_numbers<[1], [1], [0], [0], [0, 0, 1, 0], [], []>} : vector<16x32xf32>, vector<64x32xf32>, vector<16x64xf32> -> vector<16x64xf32>
    %c0_3 = arith.constant 0 : index
    %c0_4 = arith.constant 0 : index
    %3 = vector.load %arg4[%c0_3, %c0_4] : memref<16x64xf32, #tpu.memory_space<vmem>>, vector<16x64xf32>
    tpu.vector_store %arg4[%c0_3, %c0_4], %2 {strides = array<i32>} : memref<16x64xf32, #tpu.memory_space<vmem>>, vector<16x64xf32>,
    %c0_5 = arith.constant 0 : index
    %c0_6 = arith.constant 0 : index
    %4 = vector.load %arg3[%c0_5, %c0_6] : memref<128x32xf32, #tpu.memory_space<vmem>>, vector<128x32xf32>
    %cst_7 = arith.constant dense<0.000000e+00> : vector<16x128xf32>
    %5 = tpu.matmul %0, %4, %cst_7 {dimension_numbers = #tpu.dot_dimension_numbers<[1], [1], [0], [0], [0, 0, 1, 0], [], []>} : vector<16x32xf32>, vector<128x32xf32>, vector<16x128xf32> -> vector<16x128xf32>
    %c0_8 = arith.constant 0 : index
    %c0_9 = arith.constant 0 : index
    %6 = vector.load %arg5[%c0_8, %c0_9] : memref<16x128xf32, #tpu.memory_space<vmem>>, vector<16x128xf32>
    tpu.vector_store %arg5[%c0_8, %c0_9], %5 {strides = array<i32>} : memref<16x128xf32, #tpu.memory_space<vmem>>, vector<16x128xf32>,
    return
  }
  func.func @transform_0(%arg0: i32) -> (i32, i32) {
    %c0_i32 = arith.constant 0 : i32
    %c0_i32_0 = arith.constant 0 : i32
    return %arg0, %c0_i32 : i32, i32
  }
  func.func @transform_1(%arg0: i32) -> (i32, i32) {
    %c0_i32 = arith.constant 0 : i32
    %c0_i32_0 = arith.constant 0 : i32
    %c0_i32_1 = arith.constant 0 : i32
    return %c0_i32, %c0_i32_0 : i32, i32
  }
  func.func @transform_2(%arg0: i32) -> (i32, i32) {
    %c0_i32 = arith.constant 0 : i32
    %c0_i32_0 = arith.constant 0 : i32
    %c0_i32_1 = arith.constant 0 : i32
    return %c0_i32, %c0_i32_0 : i32, i32
  }
  func.func @transform_3(%arg0: i32) -> (i32, i32) {
    %c0_i32 = arith.constant 0 : i32
    %c0_i32_0 = arith.constant 0 : i32
    return %arg0, %c0_i32 : i32, i32
  }
  func.func @transform_4(%arg0: i32) -> (i32, i32) {
    %c0_i32 = arith.constant 0 : i32
    %c0_i32_0 = arith.constant 0 : i32
    return %arg0, %c0_i32 : i32, i32
  }
}

</mosaic_0001>

<llo_original>
// kernel: tpu_custom_call.1
$region0: #{tpu_custom_call.1}
  #allocation0 [shape = 'u32[]', space=smem, size = 0x4, offset = 0x4, fixed_abs, tag = 'smem constant byte address 0x4 - core index']
  #allocation1 [shape = 'u32[144,128]{1,0:T(1,128)}', space=vmem, size = 0x12000, scoped, tag = 'internal scratch']
  %s0 = inlined_call_operand.vmem [shape: f32[16,32], index: 0, kind: input, shape index: {}]
  %s1 = inlined_call_operand.vmem [shape: f32[64,32], index: 1, kind: input, shape index: {}]
  %s2 = inlined_call_operand.vmem [shape: f32[128,32], index: 2, kind: input, shape index: {}]
  %s3 = inlined_call_operand.hbm [shape: f32[16,64], index: 3, kind: output, shape index: {0}]
  %s4 = inlined_call_operand.hbm [shape: f32[16,128], index: 4, kind: output, shape index: {1}]
  %5 = xla_tuple %s3, %s4
  %s6 = sld [smem:[#allocation0]]
  $region30: #{tpu_custom_call.1} parent=0
    _
  %s8 = ssub.s32 1, %s6
  %s9 = scalar_select 0, %s8, %s6
  $region1: #{tpu_custom_call.1} parent=0
    #allocation2 [shape = 'u8[8192]{0}', space=vmem, size = 0x2000, scoped, tag = 'output window, operand 0, single buffered']
    #allocation3 [shape = 's32[1]{0}', space=sflag, size = 0x4, scoped, tag = 'scoped memory for tpu_custom_call.1']
    #allocation4 [shape = 'u8[8192]{0}', space=vmem, size = 0x2000, scoped, tag = 'output window, operand 1, single buffered']
    #allocation5 [shape = 's32[1]{0}', space=sflag, size = 0x4, scoped, tag = 'scoped memory for tpu_custom_call.1']
    %10 = vsyncpa [#allocation3], 0
    %11 = vsyncpa [#allocation5], 0
    // Predicated region
    $region2: #{tpu_custom_call.1} parent=1 // pred_check
      _
    $region3: #{tpu_custom_call.1} parent=1 // pred_check_branch
      %13 = sbr.rel (0) target = $region5
    $region4: #{tpu_custom_call.1} parent=1 // pred_region
      _
    $region5: #{tpu_custom_call.1} parent=1 // pred_fallthru
      _
    // Predicated region
    $region6: #{tpu_custom_call.1} parent=1 // pred_check
      _
    $region7: #{tpu_custom_call.1} parent=1 // pred_check_branch
      %15 = sbr.rel (0) target = $region9
    $region8: #{tpu_custom_call.1} parent=1 // pred_region
      _
    $region9: #{tpu_custom_call.1} parent=1 // pred_fallthru
      _
    // Predicated region
    $region10: #{tpu_custom_call.1} parent=1 // pred_check
      _
    $region11: #{tpu_custom_call.1} parent=1 // pred_check_branch
      %17 = sbr.rel (0) target = $region13
    $region12: #{tpu_custom_call.1} parent=1 // pred_region
      _
    $region13: #{tpu_custom_call.1} parent=1 // pred_fallthru
      _
    %v18 = vld [vmem:[%s0] sm:$0xff]
    %v19 = vld [vmem:[%s0 + $0x8] sm:$0xff]
    %v20 = vld [vmem:[%s1] sm:$0xff]
    %v21 = vld [vmem:[%s1 + $0x8] sm:$0xff]
    %v22 = vld [vmem:[%s1 + $0x10] sm:$0xff]
    %v23 = vld [vmem:[%s1 + $0x18] sm:$0xff]
    %v24 = vld [vmem:[%s1 + $0x20] sm:$0xff]
    %v25 = vld [vmem:[%s1 + $0x28] sm:$0xff]
    %v26 = vld [vmem:[%s1 + $0x30] sm:$0xff]
    %v27 = vld [vmem:[%s1 + $0x38] sm:$0xff]
    %vm28 = vcmask 261120
    %v30 = vsel %vm28, %v18, 0
    %v33 = vsel %vm28, %v19, 0
    %v36 = vsel %vm28, %v20, 0
    %v39 = vsel %vm28, %v21, 0
    %v42 = vsel %vm28, %v22, 0
    %v45 = vsel %vm28, %v23, 0
    %v48 = vsel %vm28, %v24, 0
    %v51 = vsel %vm28, %v25, 0
    %v54 = vsel %vm28, %v26, 0
    %v57 = vsel %vm28, %v27, 0
    %59 = vmatprep.subr.mxu0 0.0
    %60 = vmatpush1.xpose.msra.mxu0 %v36
    %61 = vmatprep.subr.mxu0 0.0
    %62 = vmatpush1.xpose.msra.mxu0 %v39
    %63 = vmatprep.subr.mxu0 0.0
    %64 = vmatpush1.xpose.msra.mxu0 %v42
    %65 = vmatprep.subr.mxu0 0.0
    %66 = vmatpush1.xpose.msra.mxu0 %v45
    %67 = vmatprep.subr.mxu0 0.0
    %68 = vmatpush1.xpose.msra.mxu0 %v48
    %69 = vmatprep.subr.mxu0 0.0
    %70 = vmatpush1.xpose.msra.mxu0 %v51
    %71 = vmatprep.subr.mxu0 0.0
    %72 = vmatpush1.xpose.msra.mxu0 %v54
    %73 = vmatprep.subr.mxu0 0.0
    %74 = vmatpush1.xpose.msra.mxu0 %v57
    %75 = vmatprep.subr.mxu0 0.0
    %76 = vmatpush1.xpose.msra.mxu0 0.0
    %77 = vmatprep.subr.mxu0 0.0
    %78 = vmatpush1.xpose.msra.mxu0 0.0
    %79 = vmatprep.subr.mxu0 0.0
    %80 = vmatpush1.xpose.msra.mxu0 0.0
    %81 = vmatprep.subr.mxu0 0.0
    %82 = vmatpush1.xpose.msra.mxu0 0.0
    %83 = vmatprep.subr.mxu0 0.0
    %84 = vmatpush1.xpose.msra.mxu0 0.0
    %85 = vmatprep.subr.mxu0 0.0
    %86 = vmatpush1.xpose.msra.mxu0 0.0
    %87 = vmatprep.subr.mxu0 0.0
    %88 = vmatpush1.xpose.msra.mxu0 0.0
    %89 = vmatprep.subr.mxu0 0.0
    %90 = vmatpush1.xpose.msra.mxu0 0.0
    %91 = vmatprep.subr.mxu0 0.0
    %92 = vmatpush1.xpose.msra.mxu0 0.0
    %93 = vmatprep.subr.mxu0 0.0
    %94 = vmatpush1.xpose.msra.mxu0 0.0
    %95 = vmatprep.subr.mxu0 0.0
    %96 = vmatpush1.xpose.msra.mxu0 0.0
    %97 = vmatprep.subr.mxu0 0.0
    %98 = vmatpush1.xpose.msra.mxu0 0.0
    %99 = vmatprep.subr.mxu0 0.0
    %100 = vmatpush1.xpose.msra.mxu0 0.0
    %101 = vmatprep.subr.mxu0 0.0
    %102 = vmatpush1.xpose.msra.mxu0 0.0
    %103 = vmatprep.subr.mxu0 0.0
    %104 = vmatpush1.xpose.msra.mxu0 0.0
    %105 = vmatprep.subr.mxu0 0.0
    %106 = vmatpush1.xpose.msra.mxu0 0.0
    %107 = vmatprep.subr.mxu0 0.0
    %108 = vmatpush1.xpose.msra.mxu0 0.0
    %109 = vmatprep.subr.mxu0 0.0
    %110 = vmatpush1.xpose.msra.mxu0 0.0
    %111 = vmatprep.subr.mxu0 0.0
    %112 = vmatpush1.xpose.msra.mxu0 0.0
    %113 = vmatprep.subr.mxu0 0.0
    %114 = vmatpush1.xpose.msra.mxu0 0.0
    %115 = vmatprep.subr.mxu0 0.0
    %116 = vmatpush1.xpose.msra.mxu0 0.0
    %117 = vmatprep.subr.mxu0 0.0
    %118 = vmatpush1.xpose.msra.mxu0 0.0
    %119 = vmatprep.subr.mxu0 0.0
    %120 = vmatpush1.xpose.msra.mxu0 0.0
    %121 = vmatprep.subr.mxu0 0.0
    %122 = vmatpush1.xpose.msra.mxu0 0.0
    %123 = vmatprep.mubr.f32.mxu0 0.0
    %124 = vmatmul.mubr.f32.gmra.mrb[0].mxu0 %v30
    %v125 = vpop.f32.mrb[0].mxu0
    %v126 = vadd.f32 0.0, %v125
    %v127 = vpop.f32.mrb[0].mxu0
    %128 = vmatprep.mubr.f32.mxu0 0.0
    %129 = vmatmul.mubr.f32.gmra.mrb[0].mxu0 %v33
    %v130 = vpop.f32.mrb[0].mxu0
    %v131 = vadd.f32 0.0, %v130
    %v132 = vpop.f32.mrb[0].mxu0
    %133 = vdwg.mxu0
    %vm134 = vcmask 523264
    %135 = vst.msk [vmem:[#allocation2] sm:$0xff] %vm134, %v126
    %136 = vst.msk [vmem:[#allocation2 + $0x8] sm:$0xff] %vm134, %v131
    %v137 = vld [vmem:[%s2] sm:$0xff]
    %v138 = vld [vmem:[%s2 + $0x8] sm:$0xff]
    %v139 = vld [vmem:[%s2 + $0x10] sm:$0xff]
    %v140 = vld [vmem:[%s2 + $0x18] sm:$0xff]
    %v141 = vld [vmem:[%s2 + $0x20] sm:$0xff]
    %v142 = vld [vmem:[%s2 + $0x28] sm:$0xff]
    %v143 = vld [vmem:[%s2 + $0x30] sm:$0xff]
    %v144 = vld [vmem:[%s2 + $0x38] sm:$0xff]
    %v145 = vld [vmem:[%s2 + $0x40] sm:$0xff]
    %v146 = vld [vmem:[%s2 + $0x48] sm:$0xff]
    %v147 = vld [vmem:[%s2 + $0x50] sm:$0xff]
    %v148 = vld [vmem:[%s2 + $0x58] sm:$0xff]
    %v149 = vld [vmem:[%s2 + $0x60] sm:$0xff]
    %v150 = vld [vmem:[%s2 + $0x68] sm:$0xff]
    %v151 = vld [vmem:[%s2 + $0x70] sm:$0xff]
    %v152 = vld [vmem:[%s2 + $0x78] sm:$0xff]
    %v154 = vsel %vm28, %v137, 0
    %v157 = vsel %vm28, %v138, 0
    %v160 = vsel %vm28, %v139, 0
    %v163 = vsel %vm28, %v140, 0
    %v166 = vsel %vm28, %v141, 0
    %v169 = vsel %vm28, %v142, 0
    %v172 = vsel %vm28, %v143, 0
    %v175 = vsel %vm28, %v144, 0
    %v178 = vsel %vm28, %v145, 0
    %v181 = vsel %vm28, %v146, 0
    %v184 = vsel %vm28, %v147, 0
    %v187 = vsel %vm28, %v148, 0
    %v190 = vsel %vm28, %v149, 0
    %v193 = vsel %vm28, %v150, 0
    %v196 = vsel %vm28, %v151, 0
    %v199 = vsel %vm28, %v152, 0
    %201 = vmatprep.subr.mxu0 0.0
    %202 = vmatpush1.xpose.msra.mxu0 %v154
    %203 = vmatprep.subr.mxu0 0.0
    %204 = vmatpush1.xpose.msra.mxu0 %v157
    %205 = vmatprep.subr.mxu0 0.0
    %206 = vmatpush1.xpose.msra.mxu0 %v160
    %207 = vmatprep.subr.mxu0 0.0
    %208 = vmatpush1.xpose.msra.mxu0 %v163
    %209 = vmatprep.subr.mxu0 0.0
    %210 = vmatpush1.xpose.msra.mxu0 %v166
    %211 = vmatprep.subr.mxu0 0.0
    %212 = vmatpush1.xpose.msra.mxu0 %v169
    %213 = vmatprep.subr.mxu0 0.0
    %214 = vmatpush1.xpose.msra.mxu0 %v172
    %215 = vmatprep.subr.mxu0 0.0
    %216 = vmatpush1.xpose.msra.mxu0 %v175
    %217 = vmatprep.subr.mxu0 0.0
    %218 = vmatpush1.xpose.msra.mxu0 %v178
    %219 = vmatprep.subr.mxu0 0.0
    %220 = vmatpush1.xpose.msra.mxu0 %v181
    %221 = vmatprep.subr.mxu0 0.0
    %222 = vmatpush1.xpose.msra.mxu0 %v184
    %223 = vmatprep.subr.mxu0 0.0
    %224 = vmatpush1.xpose.msra.mxu0 %v187
    %225 = vmatprep.subr.mxu0 0.0
    %226 = vmatpush1.xpose.msra.mxu0 %v190
    %227 = vmatprep.subr.mxu0 0.0
    %228 = vmatpush1.xpose.msra.mxu0 %v193
    %229 = vmatprep.subr.mxu0 0.0
    %230 = vmatpush1.xpose.msra.mxu0 %v196
    %231 = vmatprep.subr.mxu0 0.0
    %232 = vmatpush1.xpose.msra.mxu0 %v199
    %233 = vmatprep.subr.mxu0 0.0
    %234 = vmatpush1.xpose.msra.mxu0 0.0
    %235 = vmatprep.subr.mxu0 0.0
    %236 = vmatpush1.xpose.msra.mxu0 0.0
    %237 = vmatprep.subr.mxu0 0.0
    %238 = vmatpush1.xpose.msra.mxu0 0.0
    %239 = vmatprep.subr.mxu0 0.0
    %240 = vmatpush1.xpose.msra.mxu0 0.0
    %241 = vmatprep.subr.mxu0 0.0
    %242 = vmatpush1.xpose.msra.mxu0 0.0
    %243 = vmatprep.subr.mxu0 0.0
    %244 = vmatpush1.xpose.msra.mxu0 0.0
    %245 = vmatprep.subr.mxu0 0.0
    %246 = vmatpush1.xpose.msra.mxu0 0.0
    %247 = vmatprep.subr.mxu0 0.0
    %248 = vmatpush1.xpose.msra.mxu0 0.0
    %249 = vmatprep.subr.mxu0 0.0
    %250 = vmatpush1.xpose.msra.mxu0 0.0
    %251 = vmatprep.subr.mxu0 0.0
    %252 = vmatpush1.xpose.msra.mxu0 0.0
    %253 = vmatprep.subr.mxu0 0.0
    %254 = vmatpush1.xpose.msra.mxu0 0.0
    %255 = vmatprep.subr.mxu0 0.0
    %256 = vmatpush1.xpose.msra.mxu0 0.0
    %257 = vmatprep.subr.mxu0 0.0
    %258 = vmatpush1.xpose.msra.mxu0 0.0
    %259 = vmatprep.subr.mxu0 0.0
    %260 = vmatpush1.xpose.msra.mxu0 0.0
    %261 = vmatprep.subr.mxu0 0.0
    %262 = vmatpush1.xpose.msra.mxu0 0.0
    %263 = vmatprep.subr.mxu0 0.0
    %264 = vmatpush1.xpose.msra.mxu0 0.0
    %265 = vmatprep.mubr.f32.mxu0 0.0
    %266 = vmatmul.mubr.f32.gmra.mrb[0].mxu0 %v30
    %v267 = vpop.f32.mrb[0].mxu0
    %v268 = vadd.f32 0.0, %v267
    %v269 = vpop.f32.mrb[0].mxu0
    %270 = vmatprep.mubr.f32.mxu0 0.0
    %271 = vmatmul.mubr.f32.gmra.mrb[0].mxu0 %v33
    %v272 = vpop.f32.mrb[0].mxu0
    %v273 = vadd.f32 0.0, %v272
    %v274 = vpop.f32.mrb[0].mxu0
    %275 = vdwg.mxu0
    %276 = vst [vmem:[#allocation4] sm:$0xff] %v268
    %277 = vst [vmem:[#allocation4 + $0x8] sm:$0xff] %v273
    // Predicated region
    $region14: #{tpu_custom_call.1} parent=1 // pred_check
      _
    $region15: #{tpu_custom_call.1} parent=1 // pred_check_branch
      %279 = sbr.rel (0) target = $region17
    $region16: #{tpu_custom_call.1} parent=1 // pred_region
      %s281 = ssub.s32 256, 256
      %282 = vsyncadd [#allocation3], %s281
      %s283 = sshll.u32 [#allocation2], 4
      %s284 = int_to_ptr.vmem [resolvable:$true] %s283
      %289 = dma.vmem_to_hbm [thread:$0]  %s284, 256, %s3, [#allocation3], 128, 128, 8
    $region17: #{tpu_custom_call.1} parent=1 // pred_fallthru
      _
    // Predicated region
    $region18: #{tpu_custom_call.1} parent=1 // pred_check
      _
    $region19: #{tpu_custom_call.1} parent=1 // pred_check_branch
      %291 = sbr.rel (0) target = $region21
    $region20: #{tpu_custom_call.1} parent=1 // pred_region
      %s293 = ssub.s32 256, 256
      %294 = vsyncadd [#allocation5], %s293
      %s295 = sshll.u32 [#allocation4], 4
      %s296 = int_to_ptr.vmem [resolvable:$true] %s295
      %301 = dma.vmem_to_hbm [thread:$0]  %s296, 256, %s4, [#allocation5], 128, 128, 8
    $region21: #{tpu_custom_call.1} parent=1 // pred_fallthru
      _
    // Predicated region
    $region22: #{tpu_custom_call.1} parent=1 // pred_check
      _
    $region23: #{tpu_custom_call.1} parent=1 // pred_check_branch
      %303 = sbr.rel (0) target = $region25
    $region24: #{tpu_custom_call.1} parent=1 // pred_region
      %304 = dma.done [#allocation3], 256
    $region25: #{tpu_custom_call.1} parent=1 // pred_fallthru
      _
    // Predicated region
    $region26: #{tpu_custom_call.1} parent=1 // pred_check
      _
    $region27: #{tpu_custom_call.1} parent=1 // pred_check_branch
      %306 = sbr.rel (0) target = $region29
    $region28: #{tpu_custom_call.1} parent=1 // pred_region
      %307 = dma.done [#allocation5], 256
    $region29: #{tpu_custom_call.1} parent=1 // pred_fallthru
      _
    %308 = vsyncpa [#allocation3], 1
    %309 = vsyncpa [#allocation5], 1

</llo_original>
